<compile_context>
chip_gen: v5e
topology: v5e:2x2
jax: 0.10.0
libtpu: 0.0.40
codegen_flags: <defaults>
</compile_context>

<pallas_src>
import jax
import jax.numpy as jnp
from jax.experimental import pallas as pl
from jax.experimental.pallas import tpu as pltpu


# --------------------------------------------------------------------------- #
# Kernel
# --------------------------------------------------------------------------- #
def _binary_layer_kernel(x_ref, noise_ref,
                         w1_ref, b1_ref,    # ff1
                         w2_ref, b2_ref,    # ff2
                         web_ref, beb_ref,  # eb  (E  -> BIN)
                         wbe_ref, bbe_ref,  # be  (BIN -> E)
                         w3_ref, b3_ref,    # ff3
                         w4_ref, b4_ref,    # ff4
                         out_ref):
    f32 = jnp.float32

    x = x_ref[...]

    # x = relu(ff1(x) + x)
    h = jnp.dot(x, w1_ref[...], preferred_element_type=f32) + b1_ref[...] + x
    h = jnp.maximum(h, 0.0)

    # x = relu(ff2(x) + x)
    h = jnp.dot(h, w2_ref[...], preferred_element_type=f32) + b2_ref[...] + h
    h = jnp.maximum(h, 0.0)

    # binary = round(sigmoid(eb(x)))  ==  (logits > 0)
    logits = jnp.dot(h, web_ref[...], preferred_element_type=f32) + beb_ref[...]
    binary = (logits > 0.0).astype(f32)

    # PassPollute: XOR with Bernoulli(random_rate) noise (drawn in the wrapper).
    # XOR of {0,1} values == "not equal".
    binary = (binary != noise_ref[...]).astype(f32)

    # x = relu(be(binary))
    h = jnp.dot(binary, wbe_ref[...], preferred_element_type=f32) + bbe_ref[...]
    h = jnp.maximum(h, 0.0)

    # x = relu(ff3(x) + x)
    h2 = jnp.dot(h, w3_ref[...], preferred_element_type=f32) + b3_ref[...] + h
    h2 = jnp.maximum(h2, 0.0)

    # x = ff4(x)
    out_ref[...] = jnp.dot(h2, w4_ref[...], preferred_element_type=f32) + b4_ref[...]


# --------------------------------------------------------------------------- #
# Wrapper
# --------------------------------------------------------------------------- #
def _round_up(n, m):
    return ((n + m - 1) // m) * m


def _pad2(a, rows, cols):
    r, c = a.shape
    return jnp.pad(a, ((0, rows - r), (0, cols - c)))


def binary_layer_forward(x, params, seed, random_rate):
    B, E = x.shape
    BIN = params["eb_w"].shape[1]

    LANE, SUB = 128, 8
    E_pad = _round_up(max(E, LANE), LANE)      # lane-dense feature dim
    BIN_pad = _round_up(max(BIN, LANE), LANE)  # lane-dense binary dim

    # Batch tiling: large (<=512-row) tiles for big B to amortize per-step
    # overhead; minimal sublane-aligned padding for small B.
    TB = min(512, _round_up(B, SUB))
    B_pad = _round_up(B, TB)
    n_tiles = B_pad // TB

    x_p = _pad2(x.astype(jnp.float32), B_pad, E_pad)

    # PassPollute forward semantics: Bernoulli(random_rate) noise XORed with the
    # binary code.  One draw per batch element, streamed into the kernel.
    noise = jax.random.bernoulli(
        jax.random.PRNGKey(seed), random_rate, (B, BIN)).astype(jnp.float32)
    noise_p = _pad2(noise, B_pad, BIN_pad)

    # Zero-pad weights/biases once so every matmul is full-lane.  Zero padding
    # keeps the math identical on the original E/BIN sub-block.
    w1 = _pad2(params["ff1_w"], E_pad, E_pad);   b1 = _pad2(params["ff1_b"], 1, E_pad)
    w2 = _pad2(params["ff2_w"], E_pad, E_pad);   b2 = _pad2(params["ff2_b"], 1, E_pad)
    web = _pad2(params["eb_w"], E_pad, BIN_pad); beb = _pad2(params["eb_b"], 1, BIN_pad)
    wbe = _pad2(params["be_w"], BIN_pad, E_pad); bbe = _pad2(params["be_b"], 1, E_pad)
    w3 = _pad2(params["ff3_w"], E_pad, E_pad);   b3 = _pad2(params["ff3_b"], 1, E_pad)
    w4 = _pad2(params["ff4_w"], E_pad, E_pad);   b4 = _pad2(params["ff4_b"], 1, E_pad)

    weights = [w1, b1, w2, b2, web, beb, wbe, bbe, w3, b3, w4, b4]
    inputs = [x_p, noise_p] + weights

    # Batch-tiled activations; weights/biases use a constant index_map so they
    # are fetched once and stay VMEM-resident across all grid steps.
    in_specs = [
        pl.BlockSpec((TB, E_pad), lambda i: (i, 0)),
        pl.BlockSpec((TB, BIN_pad), lambda i: (i, 0)),
    ] + [pl.BlockSpec(w.shape, lambda i: (0, 0)) for w in weights]
    out_specs = pl.BlockSpec((TB, E_pad), lambda i: (i, 0))

    grid_spec = pltpu.PrefetchScalarGridSpec(
        num_scalar_prefetch=0,
        grid=(n_tiles,),
        in_specs=in_specs,
        out_specs=out_specs,
        scratch_shapes=[],
    )

    # Explicit VMEM budget: double-buffered x/noise/out tiles + resident weights
    # + ~8 live f32 intermediates per tile.  Cap at 64 MiB (v7x per-TC VMEM).
    act = TB * E_pad * 4
    bact = TB * BIN_pad * 4
    wbytes = sum(int(w.size) * 4 for w in weights)
    est = 2 * (2 * act + bact) + wbytes + 8 * act
    vmem_limit = min(max(2 * est, 8 << 20), 64 << 20)

    out_p = pl.pallas_call(
        _binary_layer_kernel,
        out_shape=jax.ShapeDtypeStruct((B_pad, E_pad), jnp.float32),
        grid_spec=grid_spec,
        compiler_params=pltpu.CompilerParams(
            dimension_semantics=("parallel",),
            vmem_limit_bytes=int(vmem_limit),
        ),
    )(*inputs)

    return out_p[:B, :E]


# --------------------------------------------------------------------------- #
# Params (PyTorch nn.Linear-style init; weights stored transposed as (in, out))
# --------------------------------------------------------------------------- #
def init_params(key, mid_embedding_size, binary_size):
    def linear(kw, kb, fan_in, fan_out):
        bound = 1.0 / (fan_in ** 0.5)
        w = jax.random.uniform(kw, (fan_in, fan_out), jnp.float32, -bound, bound)
        b = jax.random.uniform(kb, (1, fan_out), jnp.float32, -bound, bound)
        return w, b

    keys = jax.random.split(key, 12)
    params = {}
    params["ff1_w"], params["ff1_b"] = linear(keys[0], keys[1], mid_embedding_size, mid_embedding_size)
    params["ff2_w"], params["ff2_b"] = linear(keys[2], keys[3], mid_embedding_size, mid_embedding_size)
    params["eb_w"], params["eb_b"] = linear(keys[4], keys[5], mid_embedding_size, binary_size)
    params["be_w"], params["be_b"] = linear(keys[6], keys[7], binary_size, mid_embedding_size)
    params["ff3_w"], params["ff3_b"] = linear(keys[8], keys[9], mid_embedding_size, mid_embedding_size)
    params["ff4_w"], params["ff4_b"] = linear(keys[10], keys[11], mid_embedding_size, mid_embedding_size)
    return params


if __name__ == "__main__":
    B, E, BIN = 8, 32, 16          # batch, mid_embedding_size, binary_size
    RANDOM_RATE = 0.1

    key = jax.random.PRNGKey(0)
    pkey, xkey = jax.random.split(key)
    params = init_params(pkey, E, BIN)
    x = jax.random.normal(xkey, (B, E), jnp.float32)

    out = binary_layer_forward(x, params, seed=0, random_rate=RANDOM_RATE)
    jax.block_until_ready(out)
    assert out.shape == (B, E) and out.dtype == jnp.float32
    assert bool(jnp.all(jnp.isfinite(out)))
    print("KERNEL_OK")
</pallas_src>

<mosaic_0001>
module attributes {stable_mosaic.version = 11 : i64} {
  func.func @_binary_layer_kernel(%arg0: i32, %arg1: memref<8x128xf32, #tpu.memory_space<vmem>>, %arg2: memref<8x128xf32, #tpu.memory_space<vmem>>, %arg3: memref<128x128xf32, #tpu.memory_space<vmem>>, %arg4: memref<1x128xf32, #tpu.memory_space<vmem>>, %arg5: memref<128x128xf32, #tpu.memory_space<vmem>>, %arg6: memref<1x128xf32, #tpu.memory_space<vmem>>, %arg7: memref<128x128xf32, #tpu.memory_space<vmem>>, %arg8: memref<1x128xf32, #tpu.memory_space<vmem>>, %arg9: memref<128x128xf32, #tpu.memory_space<vmem>>, %arg10: memref<1x128xf32, #tpu.memory_space<vmem>>, %arg11: memref<128x128xf32, #tpu.memory_space<vmem>>, %arg12: memref<1x128xf32, #tpu.memory_space<vmem>>, %arg13: memref<128x128xf32, #tpu.memory_space<vmem>>, %arg14: memref<1x128xf32, #tpu.memory_space<vmem>>, %arg15: memref<8x128xf32, #tpu.memory_space<vmem>>) attributes {dimension_semantics = [#tpu.dimension_semantics<parallel>], iteration_bounds = array<i64: 1>, scalar_prefetch = 0 : i64, scratch_operands = 0 : i64, tpu.core_type = #tpu.core_type<tc>, window_params = [{transform_indices = @transform_0, window_bounds = array<i64: 8, 128>}, {transform_indices = @transform_1, window_bounds = array<i64: 8, 128>}, {pipeline_mode = #tpu.pipeline_mode<synchronous>, transform_indices = @transform_2, window_bounds = array<i64: 128, 128>}, {pipeline_mode = #tpu.pipeline_mode<synchronous>, transform_indices = @transform_3, window_bounds = array<i64: 1, 128>}, {pipeline_mode = #tpu.pipeline_mode<synchronous>, transform_indices = @transform_4, window_bounds = array<i64: 128, 128>}, {pipeline_mode = #tpu.pipeline_mode<synchronous>, transform_indices = @transform_5, window_bounds = array<i64: 1, 128>}, {pipeline_mode = #tpu.pipeline_mode<synchronous>, transform_indices = @transform_6, window_bounds = array<i64: 128, 128>}, {pipeline_mode = #tpu.pipeline_mode<synchronous>, transform_indices = @transform_7, window_bounds = array<i64: 1, 128>}, {pipeline_mode = #tpu.pipeline_mode<synchronous>, transform_indices = @transform_8, window_bounds = array<i64: 128, 128>}, {pipeline_mode = #tpu.pipeline_mode<synchronous>, transform_indices = @transform_9, window_bounds = array<i64: 1, 128>}, {pipeline_mode = #tpu.pipeline_mode<synchronous>, transform_indices = @transform_10, window_bounds = array<i64: 128, 128>}, {pipeline_mode = #tpu.pipeline_mode<synchronous>, transform_indices = @transform_11, window_bounds = array<i64: 1, 128>}, {pipeline_mode = #tpu.pipeline_mode<synchronous>, transform_indices = @transform_12, window_bounds = array<i64: 128, 128>}, {pipeline_mode = #tpu.pipeline_mode<synchronous>, transform_indices = @transform_13, window_bounds = array<i64: 1, 128>}, {transform_indices = @transform_14, window_bounds = array<i64: 8, 128>}]} {
    %c0 = arith.constant 0 : index
    %c0_0 = arith.constant 0 : index
    %0 = vector.load %arg1[%c0, %c0_0] : memref<8x128xf32, #tpu.memory_space<vmem>>, vector<8x128xf32>
    %c0_1 = arith.constant 0 : index
    %c0_2 = arith.constant 0 : index
    %1 = vector.load %arg3[%c0_1, %c0_2] : memref<128x128xf32, #tpu.memory_space<vmem>>, vector<128x128xf32>
    %cst = arith.constant dense<0.000000e+00> : vector<8x128xf32>
    %2 = tpu.matmul %0, %1, %cst {dimension_numbers = #tpu.dot_dimension_numbers<[1], [0], [0], [1], [0, 0, 1, 1], [], []>} : vector<8x128xf32>, vector<128x128xf32>, vector<8x128xf32> -> vector<8x128xf32>
    %c0_3 = arith.constant 0 : index
    %c0_4 = arith.constant 0 : index
    %3 = vector.load %arg4[%c0_3, %c0_4] : memref<1x128xf32, #tpu.memory_space<vmem>>, vector<1x128xf32>
    %4 = vector.broadcast %3 : vector<1x128xf32> to vector<8x128xf32>
    %5 = arith.addf %2, %4 : vector<8x128xf32>
    %6 = arith.addf %5, %0 : vector<8x128xf32>
    %cst_5 = arith.constant 0.000000e+00 : f32
    %7 = vector.broadcast %cst_5 : f32 to vector<8x128xf32>
    %8 = arith.maximumf %6, %7 : vector<8x128xf32>
    %c0_6 = arith.constant 0 : index
    %c0_7 = arith.constant 0 : index
    %9 = vector.load %arg5[%c0_6, %c0_7] : memref<128x128xf32, #tpu.memory_space<vmem>>, vector<128x128xf32>
    %cst_8 = arith.constant dense<0.000000e+00> : vector<8x128xf32>
    %10 = tpu.matmul %8, %9, %cst_8 {dimension_numbers = #tpu.dot_dimension_numbers<[1], [0], [0], [1], [0, 0, 1, 1], [], []>} : vector<8x128xf32>, vector<128x128xf32>, vector<8x128xf32> -> vector<8x128xf32>
    %c0_9 = arith.constant 0 : index
    %c0_10 = arith.constant 0 : index
    %11 = vector.load %arg6[%c0_9, %c0_10] : memref<1x128xf32, #tpu.memory_space<vmem>>, vector<1x128xf32>
    %12 = vector.broadcast %11 : vector<1x128xf32> to vector<8x128xf32>
    %13 = arith.addf %10, %12 : vector<8x128xf32>
    %14 = arith.addf %13, %8 : vector<8x128xf32>
    %cst_11 = arith.constant 0.000000e+00 : f32
    %15 = vector.broadcast %cst_11 : f32 to vector<8x128xf32>
    %16 = arith.maximumf %14, %15 : vector<8x128xf32>
    %c0_12 = arith.constant 0 : index
    %c0_13 = arith.constant 0 : index
    %17 = vector.load %arg7[%c0_12, %c0_13] : memref<128x128xf32, #tpu.memory_space<vmem>>, vector<128x128xf32>
    %cst_14 = arith.constant dense<0.000000e+00> : vector<8x128xf32>
    %18 = tpu.matmul %16, %17, %cst_14 {dimension_numbers = #tpu.dot_dimension_numbers<[1], [0], [0], [1], [0, 0, 1, 1], [], []>} : vector<8x128xf32>, vector<128x128xf32>, vector<8x128xf32> -> vector<8x128xf32>
    %c0_15 = arith.constant 0 : index
    %c0_16 = arith.constant 0 : index
    %19 = vector.load %arg8[%c0_15, %c0_16] : memref<1x128xf32, #tpu.memory_space<vmem>>, vector<1x128xf32>
    %20 = vector.broadcast %19 : vector<1x128xf32> to vector<8x128xf32>
    %21 = arith.addf %18, %20 : vector<8x128xf32>
    %cst_17 = arith.constant 0.000000e+00 : f32
    %22 = vector.broadcast %cst_17 : f32 to vector<8x128xf32>
    %23 = arith.cmpf ogt, %21, %22 : vector<8x128xf32>
    %24 = arith.extui %23 : vector<8x128xi1> to vector<8x128xi32>
    %25 = arith.sitofp %24 : vector<8x128xi32> to vector<8x128xf32>
    %c0_18 = arith.constant 0 : index
    %c0_19 = arith.constant 0 : index
    %26 = vector.load %arg2[%c0_18, %c0_19] : memref<8x128xf32, #tpu.memory_space<vmem>>, vector<8x128xf32>
    %27 = arith.cmpf one, %25, %26 : vector<8x128xf32>
    %28 = arith.extui %27 : vector<8x128xi1> to vector<8x128xi32>
    %29 = arith.sitofp %28 : vector<8x128xi32> to vector<8x128xf32>
    %c0_20 = arith.constant 0 : index
    %c0_21 = arith.constant 0 : index
    %30 = vector.load %arg9[%c0_20, %c0_21] : memref<128x128xf32, #tpu.memory_space<vmem>>, vector<128x128xf32>
    %cst_22 = arith.constant dense<0.000000e+00> : vector<8x128xf32>
    %31 = tpu.matmul %29, %30, %cst_22 {dimension_numbers = #tpu.dot_dimension_numbers<[1], [0], [0], [1], [0, 0, 1, 1], [], []>} : vector<8x128xf32>, vector<128x128xf32>, vector<8x128xf32> -> vector<8x128xf32>
    %c0_23 = arith.constant 0 : index
    %c0_24 = arith.constant 0 : index
    %32 = vector.load %arg10[%c0_23, %c0_24] : memref<1x128xf32, #tpu.memory_space<vmem>>, vector<1x128xf32>
    %33 = vector.broadcast %32 : vector<1x128xf32> to vector<8x128xf32>
    %34 = arith.addf %31, %33 : vector<8x128xf32>
    %cst_25 = arith.constant 0.000000e+00 : f32
    %35 = vector.broadcast %cst_25 : f32 to vector<8x128xf32>
    %36 = arith.maximumf %34, %35 : vector<8x128xf32>
    %c0_26 = arith.constant 0 : index
    %c0_27 = arith.constant 0 : index
    %37 = vector.load %arg11[%c0_26, %c0_27] : memref<128x128xf32, #tpu.memory_space<vmem>>, vector<128x128xf32>
    %cst_28 = arith.constant dense<0.000000e+00> : vector<8x128xf32>
    %38 = tpu.matmul %36, %37, %cst_28 {dimension_numbers = #tpu.dot_dimension_numbers<[1], [0], [0], [1], [0, 0, 1, 1], [], []>} : vector<8x128xf32>, vector<128x128xf32>, vector<8x128xf32> -> vector<8x128xf32>
    %c0_29 = arith.constant 0 : index
    %c0_30 = arith.constant 0 : index
    %39 = vector.load %arg12[%c0_29, %c0_30] : memref<1x128xf32, #tpu.memory_space<vmem>>, vector<1x128xf32>
    %40 = vector.broadcast %39 : vector<1x128xf32> to vector<8x128xf32>
    %41 = arith.addf %38, %40 : vector<8x128xf32>
    %42 = arith.addf %41, %36 : vector<8x128xf32>
    %cst_31 = arith.constant 0.000000e+00 : f32
    %43 = vector.broadcast %cst_31 : f32 to vector<8x128xf32>
    %44 = arith.maximumf %42, %43 : vector<8x128xf32>
    %c0_32 = arith.constant 0 : index
    %c0_33 = arith.constant 0 : index
    %45 = vector.load %arg13[%c0_32, %c0_33] : memref<128x128xf32, #tpu.memory_space<vmem>>, vector<128x128xf32>
    %cst_34 = arith.constant dense<0.000000e+00> : vector<8x128xf32>
    %46 = tpu.matmul %44, %45, %cst_34 {dimension_numbers = #tpu.dot_dimension_numbers<[1], [0], [0], [1], [0, 0, 1, 1], [], []>} : vector<8x128xf32>, vector<128x128xf32>, vector<8x128xf32> -> vector<8x128xf32>
    %c0_35 = arith.constant 0 : index
    %c0_36 = arith.constant 0 : index
    %47 = vector.load %arg14[%c0_35, %c0_36] : memref<1x128xf32, #tpu.memory_space<vmem>>, vector<1x128xf32>
    %48 = vector.broadcast %47 : vector<1x128xf32> to vector<8x128xf32>
    %49 = arith.addf %46, %48 : vector<8x128xf32>
    %c0_37 = arith.constant 0 : index
    %c0_38 = arith.constant 0 : index
    %50 = vector.load %arg15[%c0_37, %c0_38] : memref<8x128xf32, #tpu.memory_space<vmem>>, vector<8x128xf32>
    tpu.vector_store %arg15[%c0_37, %c0_38], %49 {strides = array<i32>} : memref<8x128xf32, #tpu.memory_space<vmem>>, vector<8x128xf32>,
    return
  }
  func.func @transform_0(%arg0: i32) -> (i32, i32) {
    %c0_i32 = arith.constant 0 : i32
    %c0_i32_0 = arith.constant 0 : i32
    return %arg0, %c0_i32 : i32, i32
  }
  func.func @transform_1(%arg0: i32) -> (i32, i32) {
    %c0_i32 = arith.constant 0 : i32
    %c0_i32_0 = arith.constant 0 : i32
    return %arg0, %c0_i32 : i32, i32
  }
  func.func @transform_2(%arg0: i32) -> (i32, i32) {
    %c0_i32 = arith.constant 0 : i32
    %c0_i32_0 = arith.constant 0 : i32
    %c0_i32_1 = arith.constant 0 : i32
    return %c0_i32, %c0_i32_0 : i32, i32
  }
  func.func @transform_3(%arg0: i32) -> (i32, i32) {
    %c0_i32 = arith.constant 0 : i32
    %c0_i32_0 = arith.constant 0 : i32
    %c0_i32_1 = arith.constant 0 : i32
    return %c0_i32, %c0_i32_0 : i32, i32
  }
  func.func @transform_4(%arg0: i32) -> (i32, i32) {
    %c0_i32 = arith.constant 0 : i32
    %c0_i32_0 = arith.constant 0 : i32
    %c0_i32_1 = arith.constant 0 : i32
    return %c0_i32, %c0_i32_0 : i32, i32
  }
  func.func @transform_5(%arg0: i32) -> (i32, i32) {
    %c0_i32 = arith.constant 0 : i32
    %c0_i32_0 = arith.constant 0 : i32
    %c0_i32_1 = arith.constant 0 : i32
    return %c0_i32, %c0_i32_0 : i32, i32
  }
  func.func @transform_6(%arg0: i32) -> (i32, i32) {
    %c0_i32 = arith.constant 0 : i32
    %c0_i32_0 = arith.constant 0 : i32
    %c0_i32_1 = arith.constant 0 : i32
    return %c0_i32, %c0_i32_0 : i32, i32
  }
  func.func @transform_7(%arg0: i32) -> (i32, i32) {
    %c0_i32 = arith.constant 0 : i32
    %c0_i32_0 = arith.constant 0 : i32
    %c0_i32_1 = arith.constant 0 : i32
    return %c0_i32, %c0_i32_0 : i32, i32
  }
  func.func @transform_8(%arg0: i32) -> (i32, i32) {
    %c0_i32 = arith.constant 0 : i32
    %c0_i32_0 = arith.constant 0 : i32
    %c0_i32_1 = arith.constant 0 : i32
    return %c0_i32, %c0_i32_0 : i32, i32
  }
  func.func @transform_9(%arg0: i32) -> (i32, i32) {
    %c0_i32 = arith.constant 0 : i32
    %c0_i32_0 = arith.constant 0 : i32
    %c0_i32_1 = arith.constant 0 : i32
    return %c0_i32, %c0_i32_0 : i32, i32
  }
  func.func @transform_10(%arg0: i32) -> (i32, i32) {
    %c0_i32 = arith.constant 0 : i32
    %c0_i32_0 = arith.constant 0 : i32
    %c0_i32_1 = arith.constant 0 : i32
    return %c0_i32, %c0_i32_0 : i32, i32
  }
  func.func @transform_11(%arg0: i32) -> (i32, i32) {
    %c0_i32 = arith.constant 0 : i32
    %c0_i32_0 = arith.constant 0 : i32
    %c0_i32_1 = arith.constant 0 : i32
    return %c0_i32, %c0_i32_0 : i32, i32
  }
  func.func @transform_12(%arg0: i32) -> (i32, i32) {
    %c0_i32 = arith.constant 0 : i32
    %c0_i32_0 = arith.constant 0 : i32
    %c0_i32_1 = arith.constant 0 : i32
    return %c0_i32, %c0_i32_0 : i32, i32
  }
  func.func @transform_13(%arg0: i32) -> (i32, i32) {
    %c0_i32 = arith.constant 0 : i32
    %c0_i32_0 = arith.constant 0 : i32
    %c0_i32_1 = arith.constant 0 : i32
    return %c0_i32, %c0_i32_0 : i32, i32
  }
  func.func @transform_14(%arg0: i32) -> (i32, i32) {
    %c0_i32 = arith.constant 0 : i32
    %c0_i32_0 = arith.constant 0 : i32
    return %arg0, %c0_i32 : i32, i32
  }
}

</mosaic_0001>

<llo_original>
// kernel: tpu_custom_call.1
$region0: #{tpu_custom_call.1}
  #allocation0 [shape = 'u32[]', space=smem, size = 0x4, offset = 0x4, fixed_abs, tag = 'smem constant byte address 0x4 - core index']
  #allocation1 [shape = 'u32[72,128]{1,0:T(1,128)}', space=vmem, size = 0x9000, scoped, tag = 'internal scratch']
  %s0 = inlined_call_operand.hbm [shape: f32[8,128], index: 0, kind: input, shape index: {}]
  %s1 = inlined_call_operand.hbm [shape: f32[8,128], index: 1, kind: input, shape index: {}]
  %s2 = inlined_call_operand.hbm [shape: f32[128,128], index: 2, kind: input, shape index: {}]
  %s3 = inlined_call_operand.vmem [shape: f32[1,128], index: 3, kind: input, shape index: {}]
  %s4 = inlined_call_operand.hbm [shape: f32[128,128], index: 4, kind: input, shape index: {}]
  %s5 = inlined_call_operand.vmem [shape: f32[1,128], index: 5, kind: input, shape index: {}]
  %s6 = inlined_call_operand.hbm [shape: f32[128,128], index: 6, kind: input, shape index: {}]
  %s7 = inlined_call_operand.vmem [shape: f32[1,128], index: 7, kind: input, shape index: {}]
  %s8 = inlined_call_operand.hbm [shape: f32[128,128], index: 8, kind: input, shape index: {}]
  %s9 = inlined_call_operand.vmem [shape: f32[1,128], index: 9, kind: input, shape index: {}]
  %s10 = inlined_call_operand.hbm [shape: f32[128,128], index: 10, kind: input, shape index: {}]
  %s11 = inlined_call_operand.vmem [shape: f32[1,128], index: 11, kind: input, shape index: {}]
  %s12 = inlined_call_operand.hbm [shape: f32[128,128], index: 12, kind: input, shape index: {}]
  %s13 = inlined_call_operand.vmem [shape: f32[1,128], index: 13, kind: input, shape index: {}]
  %s14 = inlined_call_operand.hbm [shape: f32[8,128], index: 14, kind: output, shape index: {}]
  %s15 = sld [smem:[#allocation0]]
  $region98: #{tpu_custom_call.1} parent=0
    _
  %s17 = ssub.s32 1, %s15
  %s18 = scalar_select 0, %s17, %s15
  $region1: #{tpu_custom_call.1} parent=0
    #allocation2 [shape = 'u8[4096]{0}', space=vmem, size = 0x1000, scoped, tag = 'input window, operand 0, single buffered']
    #allocation3 [shape = 's32[1]{0}', space=sflag, size = 0x4, scoped, tag = 'scoped memory for tpu_custom_call.1']
    #allocation4 [shape = 's32[1]{0}', space=sflag, size = 0x4, scoped, tag = 'scoped memory for tpu_custom_call.1']
    #allocation5 [shape = 'u8[4096]{0}', space=vmem, size = 0x1000, scoped, tag = 'input window, operand 1, single buffered']
    #allocation6 [shape = 's32[1]{0}', space=sflag, size = 0x4, scoped, tag = 'scoped memory for tpu_custom_call.1']
    #allocation7 [shape = 'u8[65536]{0}', space=vmem, size = 0x10000, scoped, tag = 'input window, operand 2, single buffered']
    #allocation8 [shape = 'u8[65536]{0}', space=vmem, size = 0x10000, scoped, tag = 'input window, operand 4, single buffered']
    #allocation9 [shape = 's32[1]{0}', space=sflag, size = 0x4, scoped, tag = 'scoped memory for tpu_custom_call.1']
    #allocation10 [shape = 'u8[65536]{0}', space=vmem, size = 0x10000, scoped, tag = 'input window, operand 6, single buffered']
    #allocation11 [shape = 'u8[65536]{0}', space=vmem, size = 0x10000, scoped, tag = 'input window, operand 8, single buffered']
    #allocation12 [shape = 's32[1]{0}', space=sflag, size = 0x4, scoped, tag = 'scoped memory for tpu_custom_call.1']
    #allocation13 [shape = 'u8[65536]{0}', space=vmem, size = 0x10000, scoped, tag = 'input window, operand 10, single buffered']
    #allocation14 [shape = 'u8[65536]{0}', space=vmem, size = 0x10000, scoped, tag = 'input window, operand 12, single buffered']
    #allocation15 [shape = 's32[1]{0}', space=sflag, size = 0x4, scoped, tag = 'scoped memory for tpu_custom_call.1']
    #allocation16 [shape = 'u8[4096]{0}', space=vmem, size = 0x1000, scoped, tag = 'output window, operand 0, single buffered']
    %19 = vsyncpa [#allocation3], 0
    %20 = vsyncpa [#allocation6], 0
    %21 = vsyncpa [#allocation9], 0
    %22 = vsyncpa [#allocation12], 0
    %23 = vsyncpa [#allocation15], 0
    %24 = vsyncpa [#allocation4], 0
    // Predicated region
    $region2: #{tpu_custom_call.1} parent=1 // pred_check
      _
    $region3: #{tpu_custom_call.1} parent=1 // pred_check_branch
      %26 = sbr.rel (0) target = $region5
    $region4: #{tpu_custom_call.1} parent=1 // pred_region
      %28 = vsyncadd [#allocation3], 0
      %s30 = sshll.u32 %s0, 4
      %s31 = int_to_ptr.hbm [resolvable:$true] %s30
      %s32 = sshll.u32 [#allocation2], 4
      %s33 = int_to_ptr.vmem [resolvable:$true] %s32
      %35 = dma.hbm_to_vmem [thread:$0]  %s31, 128, %s33, [#allocation3]
    $region5: #{tpu_custom_call.1} parent=1 // pred_fallthru
      _
    // Predicated region
    $region6: #{tpu_custom_call.1} parent=1 // pred_check
      _
    $region7: #{tpu_custom_call.1} parent=1 // pred_check_branch
      %37 = sbr.rel (0) target = $region9
    $region8: #{tpu_custom_call.1} parent=1 // pred_region
      %39 = vsyncadd [#allocation6], 0
      %s41 = sshll.u32 %s1, 4
      %s42 = int_to_ptr.hbm [resolvable:$true] %s41
      %s43 = sshll.u32 [#allocation5], 4
      %s44 = int_to_ptr.vmem [resolvable:$true] %s43
      %46 = dma.hbm_to_vmem [thread:$0]  %s42, 128, %s44, [#allocation6]
    $region9: #{tpu_custom_call.1} parent=1 // pred_fallthru
      _
    // Predicated region
    $region10: #{tpu_custom_call.1} parent=1 // pred_check
      _
    $region11: #{tpu_custom_call.1} parent=1 // pred_check_branch
      %48 = sbr.rel (0) target = $region13
    $region12: #{tpu_custom_call.1} parent=1 // pred_region
      %50 = vsyncadd [#allocation6], 0
      %s51 = sshll.u32 %s2, 4
      %s52 = int_to_ptr.hbm [resolvable:$true] %s51
      %s53 = sshll.u32 [#allocation7], 4
      %s54 = int_to_ptr.vmem [resolvable:$true] %s53
      %59 = dma.hbm_to_vmem [thread:$0]  %s52, 2048, %s54, [#allocation6], 128, 128, 8
    $region13: #{tpu_custom_call.1} parent=1 // pred_fallthru
      _
    // Predicated region
    $region14: #{tpu_custom_call.1} parent=1 // pred_check
      _
    $region15: #{tpu_custom_call.1} parent=1 // pred_check_branch
      %61 = sbr.rel (0) target = $region17
    $region16: #{tpu_custom_call.1} parent=1 // pred_region
      _
    $region17: #{tpu_custom_call.1} parent=1 // pred_fallthru
      _
    // Predicated region
    $region18: #{tpu_custom_call.1} parent=1 // pred_check
      _
    $region19: #{tpu_custom_call.1} parent=1 // pred_check_branch
      %63 = sbr.rel (0) target = $region21
    $region20: #{tpu_custom_call.1} parent=1 // pred_region
      %65 = vsyncadd [#allocation9], 0
      %s66 = sshll.u32 %s4, 4
      %s67 = int_to_ptr.hbm [resolvable:$true] %s66
      %s68 = sshll.u32 [#allocation8], 4
      %s69 = int_to_ptr.vmem [resolvable:$true] %s68
      %74 = dma.hbm_to_vmem [thread:$0]  %s67, 2048, %s69, [#allocation9], 128, 128, 8
    $region21: #{tpu_custom_call.1} parent=1 // pred_fallthru
      _
    // Predicated region
    $region22: #{tpu_custom_call.1} parent=1 // pred_check
      _
    $region23: #{tpu_custom_call.1} parent=1 // pred_check_branch
      %76 = sbr.rel (0) target = $region25
    $region24: #{tpu_custom_call.1} parent=1 // pred_region
      _
    $region25: #{tpu_custom_call.1} parent=1 // pred_fallthru
      _
    // Predicated region
    $region26: #{tpu_custom_call.1} parent=1 // pred_check
      _
    $region27: #{tpu_custom_call.1} parent=1 // pred_check_branch
      %78 = sbr.rel (0) target = $region29
    $region28: #{tpu_custom_call.1} parent=1 // pred_region
      %80 = vsyncadd [#allocation9], 0
      %s81 = sshll.u32 %s6, 4
      %s82 = int_to_ptr.hbm [resolvable:$true] %s81
      %s83 = sshll.u32 [#allocation10], 4
      %s84 = int_to_ptr.vmem [resolvable:$true] %s83
      %89 = dma.hbm_to_vmem [thread:$0]  %s82, 2048, %s84, [#allocation9], 128, 128, 8
    $region29: #{tpu_custom_call.1} parent=1 // pred_fallthru
      _
    // Predicated region
    $region30: #{tpu_custom_call.1} parent=1 // pred_check
      _
    $region31: #{tpu_custom_call.1} parent=1 // pred_check_branch
      %91 = sbr.rel (0) target = $region33
    $region32: #{tpu_custom_call.1} parent=1 // pred_region
      _
    $region33: #{tpu_custom_call.1} parent=1 // pred_fallthru
      _
    // Predicated region
    $region34: #{tpu_custom_call.1} parent=1 // pred_check
      _
    $region35: #{tpu_custom_call.1} parent=1 // pred_check_branch
      %93 = sbr.rel (0) target = $region37
    $region36: #{tpu_custom_call.1} parent=1 // pred_region
      %95 = vsyncadd [#allocation12], 0
      %s96 = sshll.u32 %s8, 4
      %s97 = int_to_ptr.hbm [resolvable:$true] %s96
      %s98 = sshll.u32 [#allocation11], 4
      %s99 = int_to_ptr.vmem [resolvable:$true] %s98
      %104 = dma.hbm_to_vmem [thread:$0]  %s97, 2048, %s99, [#allocation12], 128, 128, 8
    $region37: #{tpu_custom_call.1} parent=1 // pred_fallthru
      _
    // Predicated region
    $region38: #{tpu_custom_call.1} parent=1 // pred_check
      _
    $region39: #{tpu_custom_call.1} parent=1 // pred_check_branch
      %106 = sbr.rel (0) target = $region41
    $region40: #{tpu_custom_call.1} parent=1 // pred_region
      _
    $region41: #{tpu_custom_call.1} parent=1 // pred_fallthru
      _
    // Predicated region
    $region42: #{tpu_custom_call.1} parent=1 // pred_check
      _
    $region43: #{tpu_custom_call.1} parent=1 // pred_check_branch
      %108 = sbr.rel (0) target = $region45
    $region44: #{tpu_custom_call.1} parent=1 // pred_region
      %110 = vsyncadd [#allocation12], 0
      %s111 = sshll.u32 %s10, 4
      %s112 = int_to_ptr.hbm [resolvable:$true] %s111
      %s113 = sshll.u32 [#allocation13], 4
      %s114 = int_to_ptr.vmem [resolvable:$true] %s113
      %119 = dma.hbm_to_vmem [thread:$0]  %s112, 2048, %s114, [#allocation12], 128, 128, 8
    $region45: #{tpu_custom_call.1} parent=1 // pred_fallthru
      _
    // Predicated region
    $region46: #{tpu_custom_call.1} parent=1 // pred_check
      _
    $region47: #{tpu_custom_call.1} parent=1 // pred_check_branch
      %121 = sbr.rel (0) target = $region49
    $region48: #{tpu_custom_call.1} parent=1 // pred_region
      _
    $region49: #{tpu_custom_call.1} parent=1 // pred_fallthru
      _
    // Predicated region
    $region50: #{tpu_custom_call.1} parent=1 // pred_check
      _
    $region51: #{tpu_custom_call.1} parent=1 // pred_check_branch
      %123 = sbr.rel (0) target = $region53
    $region52: #{tpu_custom_call.1} parent=1 // pred_region
      %125 = vsyncadd [#allocation15], 0
      %s126 = sshll.u32 %s12, 4
      %s127 = int_to_ptr.hbm [resolvable:$true] %s126
      %s128 = sshll.u32 [#allocation14], 4
      %s129 = int_to_ptr.vmem [resolvable:$true] %s128
      %134 = dma.hbm_to_vmem [thread:$0]  %s127, 2048, %s129, [#allocation15], 128, 128, 8
    $region53: #{tpu_custom_call.1} parent=1 // pred_fallthru
      _
    // Predicated region
    $region54: #{tpu_custom_call.1} parent=1 // pred_check
      _
    $region55: #{tpu_custom_call.1} parent=1 // pred_check_branch
      %136 = sbr.rel (0) target = $region57
    $region56: #{tpu_custom_call.1} parent=1 // pred_region
      _
    $region57: #{tpu_custom_call.1} parent=1 // pred_fallthru
      _
    // Predicated region
    $region58: #{tpu_custom_call.1} parent=1 // pred_check
      _
    $region59: #{tpu_custom_call.1} parent=1 // pred_check_branch
      %138 = sbr.rel (0) target = $region61
    $region60: #{tpu_custom_call.1} parent=1 // pred_region
      %140 = dma.done [#allocation3], 128
    $region61: #{tpu_custom_call.1} parent=1 // pred_fallthru
      _
    // Predicated region
    $region62: #{tpu_custom_call.1} parent=1 // pred_check
      _
    $region63: #{tpu_custom_call.1} parent=1 // pred_check_branch
      %142 = sbr.rel (0) target = $region65
    $region64: #{tpu_custom_call.1} parent=1 // pred_region
      %144 = dma.done [#allocation6], 128
    $region65: #{tpu_custom_call.1} parent=1 // pred_fallthru
      _
    // Predicated region
    $region66: #{tpu_custom_call.1} parent=1 // pred_check
      _
    $region67: #{tpu_custom_call.1} parent=1 // pred_check_branch
      %146 = sbr.rel (0) target = $region69
    $region68: #{tpu_custom_call.1} parent=1 // pred_region
      %148 = dma.done [#allocation6], 2048
    $region69: #{tpu_custom_call.1} parent=1 // pred_fallthru
      _
    // Predicated region
    $region70: #{tpu_custom_call.1} parent=1 // pred_check
      _
    $region71: #{tpu_custom_call.1} parent=1 // pred_check_branch
      %150 = sbr.rel (0) target = $region73
    $region72: #{tpu_custom_call.1} parent=1 // pred_region
      %152 = dma.done [#allocation9], 2048
    $region73: #{tpu_custom_call.1} parent=1 // pred_fallthru
      _
    // Predicated region
    $region74: #{tpu_custom_call.1} parent=1 // pred_check
      _
    $region75: #{tpu_custom_call.1} parent=1 // pred_check_branch
      %154 = sbr.rel (0) target = $region77
    $region76: #{tpu_custom_call.1} parent=1 // pred_region
      %156 = dma.done [#allocation9], 2048
    $region77: #{tpu_custom_call.1} parent=1 // pred_fallthru
      _
    // Predicated region
    $region78: #{tpu_custom_call.1} parent=1 // pred_check
      _
    $region79: #{tpu_custom_call.1} parent=1 // pred_check_branch
      %158 = sbr.rel (0) target = $region81
    $region80: #{tpu_custom_call.1} parent=1 // pred_region
      %160 = dma.done [#allocation12], 2048
    $region81: #{tpu_custom_call.1} parent=1 // pred_fallthru
      _
    // Predicated region
    $region82: #{tpu_custom_call.1} parent=1 // pred_check
      _
    $region83: #{tpu_custom_call.1} parent=1 // pred_check_branch
      %162 = sbr.rel (0) target = $region85
    $region84: #{tpu_custom_call.1} parent=1 // pred_region
      %164 = dma.done [#allocation12], 2048
    $region85: #{tpu_custom_call.1} parent=1 // pred_fallthru
      _
    // Predicated region
    $region86: #{tpu_custom_call.1} parent=1 // pred_check
      _
    $region87: #{tpu_custom_call.1} parent=1 // pred_check_branch
      %166 = sbr.rel (0) target = $region89
    $region88: #{tpu_custom_call.1} parent=1 // pred_region
      %168 = dma.done [#allocation15], 2048
    $region89: #{tpu_custom_call.1} parent=1 // pred_fallthru
      _
    %v169 = vld [vmem:[#allocation2] sm:$0xff]
    %v170 = vld [vmem:[#allocation7] sm:$0xff]
    %v171 = vld [vmem:[#allocation7 + $0x8] sm:$0xff]
    %v172 = vld [vmem:[#allocation7 + $0x10] sm:$0xff]
    %v173 = vld [vmem:[#allocation7 + $0x18] sm:$0xff]
    %v174 = vld [vmem:[#allocation7 + $0x20] sm:$0xff]
    %v175 = vld [vmem:[#allocation7 + $0x28] sm:$0xff]
    %v176 = vld [vmem:[#allocation7 + $0x30] sm:$0xff]
    %v177 = vld [vmem:[#allocation7 + $0x38] sm:$0xff]
    %v178 = vld [vmem:[#allocation7 + $0x40] sm:$0xff]
    %v179 = vld [vmem:[#allocation7 + $0x48] sm:$0xff]
    %v180 = vld [vmem:[#allocation7 + $0x50] sm:$0xff]
    %v181 = vld [vmem:[#allocation7 + $0x58] sm:$0xff]
    %v182 = vld [vmem:[#allocation7 + $0x60] sm:$0xff]
    %v183 = vld [vmem:[#allocation7 + $0x68] sm:$0xff]
    %v184 = vld [vmem:[#allocation7 + $0x70] sm:$0xff]
    %v185 = vld [vmem:[#allocation7 + $0x78] sm:$0xff]
    %v186 = vld [vmem:[%s3] sm:$0x1]
    %v188 = vperm.slane %v186, 0
    %190 = vmatpush.msra.mxu0 %v185
    %191 = vmatpush.msra.mxu0 %v184
    %192 = vmatpush.msra.mxu0 %v183
    %193 = vmatpush.msra.mxu0 %v182
    %194 = vmatpush.msra.mxu0 %v181
    %195 = vmatpush.msra.mxu0 %v180
    %196 = vmatpush.msra.mxu0 %v179
    %197 = vmatpush.msra.mxu0 %v178
    %198 = vmatpush.msra.mxu0 %v177
    %199 = vmatpush.msra.mxu0 %v176
    %200 = vmatpush.msra.mxu0 %v175
    %201 = vmatpush.msra.mxu0 %v174
    %202 = vmatpush.msra.mxu0 %v173
    %203 = vmatpush.msra.mxu0 %v172
    %204 = vmatpush.msra.mxu0 %v171
    %205 = vmatpush.msra.mxu0 %v170
    %206 = vmatmul.f32.gmra.mxu0 %v169
    %v207 = vpop.f32.mrf.mxu0
    %v208 = vadd.f32 %v188, %v207
    %209 = vdwg.mxu0
    %v210 = vadd.f32 %v208, %v169
    %v211 = vmax.f32 %v210, 0.0
    %v212 = vld [vmem:[#allocation8] sm:$0xff]
    %v213 = vld [vmem:[#allocation8 + $0x8] sm:$0xff]
    %v214 = vld [vmem:[#allocation8 + $0x10] sm:$0xff]
    %v215 = vld [vmem:[#allocation8 + $0x18] sm:$0xff]
    %v216 = vld [vmem:[#allocation8 + $0x20] sm:$0xff]
    %v217 = vld [vmem:[#allocation8 + $0x28] sm:$0xff]
    %v218 = vld [vmem:[#allocation8 + $0x30] sm:$0xff]
    %v219 = vld [vmem:[#allocation8 + $0x38] sm:$0xff]
    %v220 = vld [vmem:[#allocation8 + $0x40] sm:$0xff]
    %v221 = vld [vmem:[#allocation8 + $0x48] sm:$0xff]
    %v222 = vld [vmem:[#allocation8 + $0x50] sm:$0xff]
    %v223 = vld [vmem:[#allocation8 + $0x58] sm:$0xff]
    %v224 = vld [vmem:[#allocation8 + $0x60] sm:$0xff]
    %v225 = vld [vmem:[#allocation8 + $0x68] sm:$0xff]
    %v226 = vld [vmem:[#allocation8 + $0x70] sm:$0xff]
    %v227 = vld [vmem:[#allocation8 + $0x78] sm:$0xff]
    %v228 = vld [vmem:[%s5] sm:$0x1]
    %v230 = vperm.slane %v228, 0
    %232 = vmatpush.msra.mxu0 %v227
    %233 = vmatpush.msra.mxu0 %v226
    %234 = vmatpush.msra.mxu0 %v225
    %235 = vmatpush.msra.mxu0 %v224
    %236 = vmatpush.msra.mxu0 %v223
    %237 = vmatpush.msra.mxu0 %v222
    %238 = vmatpush.msra.mxu0 %v221
    %239 = vmatpush.msra.mxu0 %v220
    %240 = vmatpush.msra.mxu0 %v219
    %241 = vmatpush.msra.mxu0 %v218
    %242 = vmatpush.msra.mxu0 %v217
    %243 = vmatpush.msra.mxu0 %v216
    %244 = vmatpush.msra.mxu0 %v215
    %245 = vmatpush.msra.mxu0 %v214
    %246 = vmatpush.msra.mxu0 %v213
    %247 = vmatpush.msra.mxu0 %v212
    %248 = vmatmul.f32.gmra.mxu0 %v211
    %v249 = vpop.f32.mrf.mxu0
    %v250 = vadd.f32 %v230, %v249
    %251 = vdwg.mxu0
    %v252 = vadd.f32 %v250, %v211
    %v253 = vmax.f32 %v252, 0.0
    %v254 = vld [vmem:[#allocation10] sm:$0xff]
    %v255 = vld [vmem:[#allocation10 + $0x8] sm:$0xff]
    %v256 = vld [vmem:[#allocation10 + $0x10] sm:$0xff]
    %v257 = vld [vmem:[#allocation10 + $0x18] sm:$0xff]
    %v258 = vld [vmem:[#allocation10 + $0x20] sm:$0xff]
    %v259 = vld [vmem:[#allocation10 + $0x28] sm:$0xff]
    %v260 = vld [vmem:[#allocation10 + $0x30] sm:$0xff]
    %v261 = vld [vmem:[#allocation10 + $0x38] sm:$0xff]
    %v262 = vld [vmem:[#allocation10 + $0x40] sm:$0xff]
    %v263 = vld [vmem:[#allocation10 + $0x48] sm:$0xff]
    %v264 = vld [vmem:[#allocation10 + $0x50] sm:$0xff]
    %v265 = vld [vmem:[#allocation10 + $0x58] sm:$0xff]
    %v266 = vld [vmem:[#allocation10 + $0x60] sm:$0xff]
    %v267 = vld [vmem:[#allocation10 + $0x68] sm:$0xff]
    %v268 = vld [vmem:[#allocation10 + $0x70] sm:$0xff]
    %v269 = vld [vmem:[#allocation10 + $0x78] sm:$0xff]
    %v270 = vld [vmem:[%s7] sm:$0x1]
    %v272 = vperm.slane %v270, 0
    %274 = vmatpush.msra.mxu0 %v269
    %275 = vmatpush.msra.mxu0 %v268
    %276 = vmatpush.msra.mxu0 %v267
    %277 = vmatpush.msra.mxu0 %v266
    %278 = vmatpush.msra.mxu0 %v265
    %279 = vmatpush.msra.mxu0 %v264
    %280 = vmatpush.msra.mxu0 %v263
    %281 = vmatpush.msra.mxu0 %v262
    %282 = vmatpush.msra.mxu0 %v261
    %283 = vmatpush.msra.mxu0 %v260
    %284 = vmatpush.msra.mxu0 %v259
    %285 = vmatpush.msra.mxu0 %v258
    %286 = vmatpush.msra.mxu0 %v257
    %287 = vmatpush.msra.mxu0 %v256
    %288 = vmatpush.msra.mxu0 %v255
    %289 = vmatpush.msra.mxu0 %v254
    %290 = vmatmul.f32.gmra.mxu0 %v253
    %v291 = vpop.f32.mrf.mxu0
    %v292 = vadd.f32 %v272, %v291
    %293 = vdwg.mxu0
    %vm294 = vcmp.gt.f32.partialorder %v292, 0.0
    %v295 = vsel %vm294, 1, 0
    %v296 = vcvt.s32.f32 %v295
    %v297 = vld [vmem:[#allocation5] sm:$0xff]
    %vm298 = vcmp.ne.f32.partialorder %v296, %v297
    %v299 = vsel %vm298, 1, 0
    %v300 = vcvt.s32.f32 %v299
    %v301 = vld [vmem:[#allocation11] sm:$0xff]
    %v302 = vld [vmem:[#allocation11 + $0x8] sm:$0xff]
    %v303 = vld [vmem:[#allocation11 + $0x10] sm:$0xff]
    %v304 = vld [vmem:[#allocation11 + $0x18] sm:$0xff]
    %v305 = vld [vmem:[#allocation11 + $0x20] sm:$0xff]
    %v306 = vld [vmem:[#allocation11 + $0x28] sm:$0xff]
    %v307 = vld [vmem:[#allocation11 + $0x30] sm:$0xff]
    %v308 = vld [vmem:[#allocation11 + $0x38] sm:$0xff]
    %v309 = vld [vmem:[#allocation11 + $0x40] sm:$0xff]
    %v310 = vld [vmem:[#allocation11 + $0x48] sm:$0xff]
    %v311 = vld [vmem:[#allocation11 + $0x50] sm:$0xff]
    %v312 = vld [vmem:[#allocation11 + $0x58] sm:$0xff]
    %v313 = vld [vmem:[#allocation11 + $0x60] sm:$0xff]
    %v314 = vld [vmem:[#allocation11 + $0x68] sm:$0xff]
    %v315 = vld [vmem:[#allocation11 + $0x70] sm:$0xff]
    %v316 = vld [vmem:[#allocation11 + $0x78] sm:$0xff]
    %v317 = vld [vmem:[%s9] sm:$0x1]
    %v319 = vperm.slane %v317, 0
    %321 = vmatpush.msra.mxu0 %v316
    %322 = vmatpush.msra.mxu0 %v315
    %323 = vmatpush.msra.mxu0 %v314
    %324 = vmatpush.msra.mxu0 %v313
    %325 = vmatpush.msra.mxu0 %v312
    %326 = vmatpush.msra.mxu0 %v311
    %327 = vmatpush.msra.mxu0 %v310
    %328 = vmatpush.msra.mxu0 %v309
    %329 = vmatpush.msra.mxu0 %v308
    %330 = vmatpush.msra.mxu0 %v307
    %331 = vmatpush.msra.mxu0 %v306
    %332 = vmatpush.msra.mxu0 %v305
    %333 = vmatpush.msra.mxu0 %v304
    %334 = vmatpush.msra.mxu0 %v303
    %335 = vmatpush.msra.mxu0 %v302
    %336 = vmatpush.msra.mxu0 %v301
    %337 = vmatmul.f32.gmra.mxu0 %v300
    %v338 = vpop.f32.mrf.mxu0
    %v339 = vadd.f32 %v319, %v338
    %340 = vdwg.mxu0
    %v341 = vmax.f32 %v339, 0.0
    %v342 = vld [vmem:[#allocation13] sm:$0xff]
    %v343 = vld [vmem:[#allocation13 + $0x8] sm:$0xff]
    %v344 = vld [vmem:[#allocation13 + $0x10] sm:$0xff]
    %v345 = vld [vmem:[#allocation13 + $0x18] sm:$0xff]
    %v346 = vld [vmem:[#allocation13 + $0x20] sm:$0xff]
    %v347 = vld [vmem:[#allocation13 + $0x28] sm:$0xff]
    %v348 = vld [vmem:[#allocation13 + $0x30] sm:$0xff]
    %v349 = vld [vmem:[#allocation13 + $0x38] sm:$0xff]
    %v350 = vld [vmem:[#allocation13 + $0x40] sm:$0xff]
    %v351 = vld [vmem:[#allocation13 + $0x48] sm:$0xff]
    %v352 = vld [vmem:[#allocation13 + $0x50] sm:$0xff]
    %v353 = vld [vmem:[#allocation13 + $0x58] sm:$0xff]
    %v354 = vld [vmem:[#allocation13 + $0x60] sm:$0xff]
    %v355 = vld [vmem:[#allocation13 + $0x68] sm:$0xff]
    %v356 = vld [vmem:[#allocation13 + $0x70] sm:$0xff]
    %v357 = vld [vmem:[#allocation13 + $0x78] sm:$0xff]
    %v358 = vld [vmem:[%s11] sm:$0x1]
    %v360 = vperm.slane %v358, 0
    %362 = vmatpush.msra.mxu0 %v357
    %363 = vmatpush.msra.mxu0 %v356
    %364 = vmatpush.msra.mxu0 %v355
    %365 = vmatpush.msra.mxu0 %v354
    %366 = vmatpush.msra.mxu0 %v353
    %367 = vmatpush.msra.mxu0 %v352
    %368 = vmatpush.msra.mxu0 %v351
    %369 = vmatpush.msra.mxu0 %v350
    %370 = vmatpush.msra.mxu0 %v349
    %371 = vmatpush.msra.mxu0 %v348
    %372 = vmatpush.msra.mxu0 %v347
    %373 = vmatpush.msra.mxu0 %v346
    %374 = vmatpush.msra.mxu0 %v345
    %375 = vmatpush.msra.mxu0 %v344
    %376 = vmatpush.msra.mxu0 %v343
    %377 = vmatpush.msra.mxu0 %v342
    %378 = vmatmul.f32.gmra.mxu0 %v341
    %v379 = vpop.f32.mrf.mxu0
    %v380 = vadd.f32 %v360, %v379
    %381 = vdwg.mxu0
    %v382 = vadd.f32 %v380, %v341
    %v383 = vmax.f32 %v382, 0.0
    %v384 = vld [vmem:[#allocation14] sm:$0xff]
    %v385 = vld [vmem:[#allocation14 + $0x8] sm:$0xff]
    %v386 = vld [vmem:[#allocation14 + $0x10] sm:$0xff]
    %v387 = vld [vmem:[#allocation14 + $0x18] sm:$0xff]
    %v388 = vld [vmem:[#allocation14 + $0x20] sm:$0xff]
    %v389 = vld [vmem:[#allocation14 + $0x28] sm:$0xff]
    %v390 = vld [vmem:[#allocation14 + $0x30] sm:$0xff]
    %v391 = vld [vmem:[#allocation14 + $0x38] sm:$0xff]
    %v392 = vld [vmem:[#allocation14 + $0x40] sm:$0xff]
    %v393 = vld [vmem:[#allocation14 + $0x48] sm:$0xff]
    %v394 = vld [vmem:[#allocation14 + $0x50] sm:$0xff]
    %v395 = vld [vmem:[#allocation14 + $0x58] sm:$0xff]
    %v396 = vld [vmem:[#allocation14 + $0x60] sm:$0xff]
    %v397 = vld [vmem:[#allocation14 + $0x68] sm:$0xff]
    %v398 = vld [vmem:[#allocation14 + $0x70] sm:$0xff]
    %v399 = vld [vmem:[#allocation14 + $0x78] sm:$0xff]
    %v400 = vld [vmem:[%s13] sm:$0x1]
    %v402 = vperm.slane %v400, 0
    %404 = vmatpush.msra.mxu0 %v399
    %405 = vmatpush.msra.mxu0 %v398
    %406 = vmatpush.msra.mxu0 %v397
    %407 = vmatpush.msra.mxu0 %v396
    %408 = vmatpush.msra.mxu0 %v395
    %409 = vmatpush.msra.mxu0 %v394
    %410 = vmatpush.msra.mxu0 %v393
    %411 = vmatpush.msra.mxu0 %v392
    %412 = vmatpush.msra.mxu0 %v391
    %413 = vmatpush.msra.mxu0 %v390
    %414 = vmatpush.msra.mxu0 %v389
    %415 = vmatpush.msra.mxu0 %v388
    %416 = vmatpush.msra.mxu0 %v387
    %417 = vmatpush.msra.mxu0 %v386
    %418 = vmatpush.msra.mxu0 %v385
    %419 = vmatpush.msra.mxu0 %v384
    %420 = vmatmul.f32.gmra.mxu0 %v383
    %v421 = vpop.f32.mrf.mxu0
    %v422 = vadd.f32 %v402, %v421
    %423 = vdwg.mxu0
    %424 = vst [vmem:[#allocation16] sm:$0xff] %v422
    // Predicated region
    $region90: #{tpu_custom_call.1} parent=1 // pred_check
      _
    $region91: #{tpu_custom_call.1} parent=1 // pred_check_branch
      %426 = sbr.rel (0) target = $region93
    $region92: #{tpu_custom_call.1} parent=1 // pred_region
      %428 = vsyncadd [#allocation4], 0
      %s430 = sshll.u32 [#allocation16], 4
      %s431 = int_to_ptr.vmem [resolvable:$true] %s430
      %s432 = sshll.u32 %s14, 4
      %s433 = int_to_ptr.hbm [resolvable:$true] %s432
      %435 = dma.vmem_to_hbm [thread:$0]  %s431, 128, %s433, [#allocation4]
    $region93: #{tpu_custom_call.1} parent=1 // pred_fallthru
      _
    // Predicated region
    $region94: #{tpu_custom_call.1} parent=1 // pred_check
      _
    $region95: #{tpu_custom_call.1} parent=1 // pred_check_branch
      %437 = sbr.rel (0) target = $region97
    $region96: #{tpu_custom_call.1} parent=1 // pred_region
      %439 = dma.done [#allocation4], 128
    $region97: #{tpu_custom_call.1} parent=1 // pred_fallthru
      _
    %440 = vsyncpa [#allocation3], 1
    %441 = vsyncpa [#allocation6], 1
    %442 = vsyncpa [#allocation9], 1
    %443 = vsyncpa [#allocation12], 1
    %444 = vsyncpa [#allocation15], 1
    %445 = vsyncpa [#allocation4], 1

</llo_original>
